<compile_context>
chip_gen: v6e
topology: v6e:2x2x1
jax: 0.10.0
libtpu: 0.0.40
codegen_flags: <defaults>
</compile_context>

<pallas_src>
import jax
import jax.numpy as jnp
from jax.experimental import pallas as pl
from jax.experimental.pallas import tpu as pltpu

_SUBLANE = 8
_LANE = 128


def _mlp_kernel(x_ref, w1_ref, w2_ref, w3_ref, bias_ref, o_ref):
    """Whole 3-layer MLP on one batch tile; weights are VMEM-resident."""
    n_hidden = w1_ref.shape[1]
    n_out_p = w3_ref.shape[1]

    b1 = bias_ref[0:1, :n_hidden]   # (1, n_hidden)
    b2 = bias_ref[1:2, :n_hidden]   # (1, n_hidden)
    b3 = bias_ref[2:3, :n_out_p]    # (1, n_out_p)

    x = x_ref[...]
    h = jnp.dot(x, w1_ref[...], preferred_element_type=jnp.float32) + b1
    h = jnp.maximum(h, 0.0)
    h = jnp.dot(h, w2_ref[...], preferred_element_type=jnp.float32) + b2
    h = jnp.maximum(h, 0.0)
    y = jnp.dot(h, w3_ref[...], preferred_element_type=jnp.float32) + b3
    o_ref[...] = y.astype(o_ref.dtype)


def sim_model_forward(x, params, *, tile_m=512):
    """params = (w1, b1, w2, b2, w3, b3); w_i stored (in, out), b_i stored (out,)."""
    w1, b1, w2, b2, w3, b3 = params
    batch, n_in = x.shape
    n_hidden = w1.shape[1]
    n_out = w3.shape[1]

    # --- lane-dense output: pad last layer's output dim up to a multiple of 128 ---
    n_out_p = max(_LANE, pl.cdiv(n_out, _LANE) * _LANE)
    w3p = jnp.zeros((n_hidden, n_out_p), w3.dtype).at[:, :n_out].set(w3)
    b3p = jnp.zeros((n_out_p,), b3.dtype).at[:n_out].set(b3)

    # --- pack all biases into one (3, P) array -> a single input DMA ---
    pack_w = max(n_hidden, n_out_p)
    bias = jnp.zeros((3, pack_w), jnp.float32)
    bias = bias.at[0, :n_hidden].set(b1.astype(jnp.float32))
    bias = bias.at[1, :n_hidden].set(b2.astype(jnp.float32))
    bias = bias.at[2, :n_out_p].set(b3p.astype(jnp.float32))

    # --- batch tiling: tile_m rows per grid step (multiple of 8 sublanes) ---
    batch_p8 = pl.cdiv(batch, _SUBLANE) * _SUBLANE
    tile_m = max(_SUBLANE, min((tile_m // _SUBLANE) * _SUBLANE, batch_p8))
    num_tiles = pl.cdiv(batch_p8, tile_m)
    batch_p = num_tiles * tile_m
    if batch_p != batch:
        x = jnp.zeros((batch_p, n_in), x.dtype).at[:batch].set(x)

    flops = 2 * batch_p * (n_in * n_hidden + n_hidden * n_hidden + n_hidden * n_out_p)
    bytes_accessed = 4 * (
        batch_p * n_in + n_in * n_hidden + n_hidden * n_hidden
        + n_hidden * n_out_p + 3 * pack_w + batch_p * n_out_p
    )

    out_p = pl.pallas_call(
        _mlp_kernel,
        out_shape=jax.ShapeDtypeStruct((batch_p, n_out_p), jnp.float32),
        grid=(num_tiles,),
        in_specs=[
            pl.BlockSpec((tile_m, n_in), lambda i: (i, 0)),          # x: batch-tiled
            pl.BlockSpec((n_in, n_hidden), lambda i: (0, 0)),        # w1: resident
            pl.BlockSpec((n_hidden, n_hidden), lambda i: (0, 0)),    # w2: resident
            pl.BlockSpec((n_hidden, n_out_p), lambda i: (0, 0)),     # w3 (padded): resident
            pl.BlockSpec((3, pack_w), lambda i: (0, 0)),             # packed biases: resident
        ],
        out_specs=pl.BlockSpec((tile_m, n_out_p), lambda i: (i, 0)),  # lane-dense store
        compiler_params=pltpu.CompilerParams(
            dimension_semantics=("parallel",),  # shard batch tiles across TCs (v7x)
        ),
        cost_estimate=pl.CostEstimate(
            flops=flops, transcendentals=0, bytes_accessed=bytes_accessed
        ),
    )(x, w1, w2, w3p, bias)

    # Slice away batch padding and lane padding.
    return out_p[:batch, :n_out]


def init_params(key, n_input_params, n_output_params):
    """nn.Linear default init (uniform +/- 1/sqrt(fan_in)); weights stored (in, out)."""
    n_hidden = n_input_params * 4
    keys = jax.random.split(key, 6)

    def linear(kw, kb, fan_in, fan_out):
        bound = 1.0 / jnp.sqrt(jnp.float32(fan_in))
        w = jax.random.uniform(kw, (fan_in, fan_out), jnp.float32, -bound, bound)
        b = jax.random.uniform(kb, (fan_out,), jnp.float32, -bound, bound)
        return w, b

    w1, b1 = linear(keys[0], keys[1], n_input_params, n_hidden)
    w2, b2 = linear(keys[2], keys[3], n_hidden, n_hidden)
    w3, b3 = linear(keys[4], keys[5], n_hidden, n_output_params)
    return (w1, b1, w2, b2, w3, b3)


def reference_forward(x, params):
    w1, b1, w2, b2, w3, b3 = params
    h1 = jnp.maximum(x @ w1 + b1, 0.0)
    h2 = jnp.maximum(h1 @ w2 + b2, 0.0)
    return h2 @ w3 + b3


if __name__ == "__main__":
    n_input_params = 8
    n_output_params = 4
    batch = 16

    key = jax.random.PRNGKey(0)
    k_x, k_p = jax.random.split(key)
    x = jax.random.normal(k_x, (batch, n_input_params), dtype=jnp.float32)
    params = init_params(k_p, n_input_params, n_output_params)

    out = sim_model_forward(x, params)
    out = jax.block_until_ready(out)

    ref = reference_forward(x, params)
    assert out.shape == (batch, n_output_params)
    assert jnp.allclose(out, ref, atol=1e-5, rtol=1e-5)

    # Also exercise a batch that is not a multiple of the tile / sublane size.
    x2 = jax.random.normal(jax.random.PRNGKey(1), (37, n_input_params), jnp.float32)
    out2 = jax.block_until_ready(sim_model_forward(x2, params, tile_m=16))
    assert jnp.allclose(out2, reference_forward(x2, params), atol=1e-5, rtol=1e-5)

    print("KERNEL_OK")
</pallas_src>

<mosaic_0001>
module attributes {stable_mosaic.version = 11 : i64} {
  func.func @_mlp_kernel(%arg0: i32, %arg1: memref<16x8xf32, #tpu.memory_space<vmem>>, %arg2: memref<8x32xf32, #tpu.memory_space<vmem>>, %arg3: memref<32x32xf32, #tpu.memory_space<vmem>>, %arg4: memref<32x128xf32, #tpu.memory_space<vmem>>, %arg5: memref<3x128xf32, #tpu.memory_space<vmem>>, %arg6: memref<16x128xf32, #tpu.memory_space<vmem>>) attributes {dimension_semantics = [#tpu.dimension_semantics<parallel>], iteration_bounds = array<i64: 1>, scalar_prefetch = 0 : i64, scratch_operands = 0 : i64, tpu.core_type = #tpu.core_type<tc>, window_params = [{transform_indices = @transform_0, window_bounds = array<i64: 16, 8>}, {pipeline_mode = #tpu.pipeline_mode<synchronous>, transform_indices = @transform_1, window_bounds = array<i64: 8, 32>}, {pipeline_mode = #tpu.pipeline_mode<synchronous>, transform_indices = @transform_2, window_bounds = array<i64: 32, 32>}, {pipeline_mode = #tpu.pipeline_mode<synchronous>, transform_indices = @transform_3, window_bounds = array<i64: 32, 128>}, {pipeline_mode = #tpu.pipeline_mode<synchronous>, transform_indices = @transform_4, window_bounds = array<i64: 3, 128>}, {transform_indices = @transform_5, window_bounds = array<i64: 16, 128>}]} {
    %c0 = arith.constant 0 : index
    %c0_0 = arith.constant 0 : index
    %0 = vector.load %arg5[%c0, %c0_0] : memref<3x128xf32, #tpu.memory_space<vmem>>, vector<1x32xf32>
    %c1 = arith.constant 1 : index
    %c0_1 = arith.constant 0 : index
    %1 = vector.load %arg5[%c1, %c0_1] : memref<3x128xf32, #tpu.memory_space<vmem>>, vector<1x32xf32>
    %c2 = arith.constant 2 : index
    %c0_2 = arith.constant 0 : index
    %2 = vector.load %arg5[%c2, %c0_2] : memref<3x128xf32, #tpu.memory_space<vmem>>, vector<1x128xf32>
    %c0_3 = arith.constant 0 : index
    %c0_4 = arith.constant 0 : index
    %3 = vector.load %arg1[%c0_3, %c0_4] : memref<16x8xf32, #tpu.memory_space<vmem>>, vector<16x8xf32>
    %c0_5 = arith.constant 0 : index
    %c0_6 = arith.constant 0 : index
    %4 = vector.load %arg2[%c0_5, %c0_6] : memref<8x32xf32, #tpu.memory_space<vmem>>, vector<8x32xf32>
    %cst = arith.constant dense<0.000000e+00> : vector<16x32xf32>
    %5 = tpu.matmul %3, %4, %cst {dimension_numbers = #tpu.dot_dimension_numbers<[1], [0], [0], [1], [0, 0, 1, 1], [], []>} : vector<16x8xf32>, vector<8x32xf32>, vector<16x32xf32> -> vector<16x32xf32>
    %6 = vector.broadcast %0 : vector<1x32xf32> to vector<16x32xf32>
    %7 = arith.addf %5, %6 : vector<16x32xf32>
    %cst_7 = arith.constant 0.000000e+00 : f32
    %8 = vector.broadcast %cst_7 : f32 to vector<16x32xf32>
    %9 = arith.maximumf %7, %8 : vector<16x32xf32>
    %c0_8 = arith.constant 0 : index
    %c0_9 = arith.constant 0 : index
    %10 = vector.load %arg3[%c0_8, %c0_9] : memref<32x32xf32, #tpu.memory_space<vmem>>, vector<32x32xf32>
    %cst_10 = arith.constant dense<0.000000e+00> : vector<16x32xf32>
    %11 = tpu.matmul %9, %10, %cst_10 {dimension_numbers = #tpu.dot_dimension_numbers<[1], [0], [0], [1], [0, 0, 1, 1], [], []>} : vector<16x32xf32>, vector<32x32xf32>, vector<16x32xf32> -> vector<16x32xf32>
    %12 = vector.broadcast %1 : vector<1x32xf32> to vector<16x32xf32>
    %13 = arith.addf %11, %12 : vector<16x32xf32>
    %cst_11 = arith.constant 0.000000e+00 : f32
    %14 = vector.broadcast %cst_11 : f32 to vector<16x32xf32>
    %15 = arith.maximumf %13, %14 : vector<16x32xf32>
    %c0_12 = arith.constant 0 : index
    %c0_13 = arith.constant 0 : index
    %16 = vector.load %arg4[%c0_12, %c0_13] : memref<32x128xf32, #tpu.memory_space<vmem>>, vector<32x128xf32>
    %cst_14 = arith.constant dense<0.000000e+00> : vector<16x128xf32>
    %17 = tpu.matmul %15, %16, %cst_14 {dimension_numbers = #tpu.dot_dimension_numbers<[1], [0], [0], [1], [0, 0, 1, 1], [], []>} : vector<16x32xf32>, vector<32x128xf32>, vector<16x128xf32> -> vector<16x128xf32>
    %18 = vector.broadcast %2 : vector<1x128xf32> to vector<16x128xf32>
    %19 = arith.addf %17, %18 : vector<16x128xf32>
    %c0_15 = arith.constant 0 : index
    %c0_16 = arith.constant 0 : index
    %20 = vector.load %arg6[%c0_15, %c0_16] : memref<16x128xf32, #tpu.memory_space<vmem>>, vector<16x128xf32>
    tpu.vector_store %arg6[%c0_15, %c0_16], %19 {strides = array<i32>} : memref<16x128xf32, #tpu.memory_space<vmem>>, vector<16x128xf32>,
    return
  }
  func.func @transform_0(%arg0: i32) -> (i32, i32) {
    %c0_i32 = arith.constant 0 : i32
    %c0_i32_0 = arith.constant 0 : i32
    return %arg0, %c0_i32 : i32, i32
  }
  func.func @transform_1(%arg0: i32) -> (i32, i32) {
    %c0_i32 = arith.constant 0 : i32
    %c0_i32_0 = arith.constant 0 : i32
    %c0_i32_1 = arith.constant 0 : i32
    return %c0_i32, %c0_i32_0 : i32, i32
  }
  func.func @transform_2(%arg0: i32) -> (i32, i32) {
    %c0_i32 = arith.constant 0 : i32
    %c0_i32_0 = arith.constant 0 : i32
    %c0_i32_1 = arith.constant 0 : i32
    return %c0_i32, %c0_i32_0 : i32, i32
  }
  func.func @transform_3(%arg0: i32) -> (i32, i32) {
    %c0_i32 = arith.constant 0 : i32
    %c0_i32_0 = arith.constant 0 : i32
    %c0_i32_1 = arith.constant 0 : i32
    return %c0_i32, %c0_i32_0 : i32, i32
  }
  func.func @transform_4(%arg0: i32) -> (i32, i32) {
    %c0_i32 = arith.constant 0 : i32
    %c0_i32_0 = arith.constant 0 : i32
    %c0_i32_1 = arith.constant 0 : i32
    return %c0_i32, %c0_i32_0 : i32, i32
  }
  func.func @transform_5(%arg0: i32) -> (i32, i32) {
    %c0_i32 = arith.constant 0 : i32
    %c0_i32_0 = arith.constant 0 : i32
    return %arg0, %c0_i32 : i32, i32
  }
}

</mosaic_0001>

<llo_original>
// kernel: tpu_custom_call.1
$region0: #{tpu_custom_call.1}
  #allocation0 [shape = 'u32[]', space=smem, size = 0x4, offset = 0x4, fixed_abs, tag = 'smem constant byte address 0x4 - core index']
  #allocation1 [shape = 'u32[144,128]{1,0:T(1,128)}', space=vmem, size = 0x12000, scoped, tag = 'internal scratch']
  %s0 = inlined_call_operand.vmem [shape: f32[16,8], index: 0, kind: input, shape index: {}]
  %s1 = inlined_call_operand.vmem [shape: f32[8,32], index: 1, kind: input, shape index: {}]
  %s2 = inlined_call_operand.hbm [shape: f32[32,32], index: 2, kind: input, shape index: {}]
  %s3 = inlined_call_operand.hbm [shape: f32[32,128], index: 3, kind: input, shape index: {}]
  %s4 = inlined_call_operand.vmem [shape: f32[3,128], index: 4, kind: input, shape index: {}]
  %s5 = inlined_call_operand.hbm [shape: f32[16,128], index: 5, kind: output, shape index: {}]
  %s6 = sld [smem:[#allocation0]]
  $region38: #{tpu_custom_call.1} parent=0
    _
  %s8 = ssub.s32 1, %s6
  %s9 = scalar_select 0, %s8, %s6
  $region1: #{tpu_custom_call.1} parent=0
    #allocation2 [shape = 'u8[16384]{0}', space=vmem, size = 0x4000, scoped, tag = 'input window, operand 2, single buffered']
    #allocation3 [shape = 's32[1]{0}', space=sflag, size = 0x4, scoped, tag = 'scoped memory for tpu_custom_call.1']
    #allocation4 [shape = 's32[1]{0}', space=sflag, size = 0x4, scoped, tag = 'scoped memory for tpu_custom_call.1']
    #allocation5 [shape = 'u8[16384]{0}', space=vmem, size = 0x4000, scoped, tag = 'input window, operand 3, single buffered']
    #allocation6 [shape = 's32[1]{0}', space=sflag, size = 0x4, scoped, tag = 'scoped memory for tpu_custom_call.1']
    #allocation7 [shape = 'u8[8192]{0}', space=vmem, size = 0x2000, scoped, tag = 'output window, operand 0, single buffered']
    %10 = vsyncpa [#allocation3], 0
    %11 = vsyncpa [#allocation6], 0
    %12 = vsyncpa [#allocation4], 0
    // Predicated region
    $region2: #{tpu_custom_call.1} parent=1 // pred_check
      _
    $region3: #{tpu_custom_call.1} parent=1 // pred_check_branch
      %14 = sbr.rel (0) target = $region5
    $region4: #{tpu_custom_call.1} parent=1 // pred_region
      _
    $region5: #{tpu_custom_call.1} parent=1 // pred_fallthru
      _
    // Predicated region
    $region6: #{tpu_custom_call.1} parent=1 // pred_check
      _
    $region7: #{tpu_custom_call.1} parent=1 // pred_check_branch
      %16 = sbr.rel (0) target = $region9
    $region8: #{tpu_custom_call.1} parent=1 // pred_region
      _
    $region9: #{tpu_custom_call.1} parent=1 // pred_fallthru
      _
    // Predicated region
    $region10: #{tpu_custom_call.1} parent=1 // pred_check
      _
    $region11: #{tpu_custom_call.1} parent=1 // pred_check_branch
      %18 = sbr.rel (0) target = $region13
    $region12: #{tpu_custom_call.1} parent=1 // pred_region
      %s20 = ssub.s32 512, 512
      %21 = vsyncadd [#allocation3], %s20
      %s22 = sshll.u32 [#allocation2], 4
      %s23 = int_to_ptr.vmem [resolvable:$true] %s22
      %28 = dma.hbm_to_vmem [thread:$0]  %s2, 512, %s23, [#allocation3], 128, 128, 8
    $region13: #{tpu_custom_call.1} parent=1 // pred_fallthru
      _
    // Predicated region
    $region14: #{tpu_custom_call.1} parent=1 // pred_check
      _
    $region15: #{tpu_custom_call.1} parent=1 // pred_check_branch
      %30 = sbr.rel (0) target = $region17
    $region16: #{tpu_custom_call.1} parent=1 // pred_region
      %s32 = ssub.s32 512, 512
      %33 = vsyncadd [#allocation6], %s32
      %s34 = sshll.u32 [#allocation5], 4
      %s35 = int_to_ptr.vmem [resolvable:$true] %s34
      %40 = dma.hbm_to_vmem [thread:$0]  %s3, 512, %s35, [#allocation6], 128, 128, 8
    $region17: #{tpu_custom_call.1} parent=1 // pred_fallthru
      _
    // Predicated region
    $region18: #{tpu_custom_call.1} parent=1 // pred_check
      _
    $region19: #{tpu_custom_call.1} parent=1 // pred_check_branch
      %42 = sbr.rel (0) target = $region21
    $region20: #{tpu_custom_call.1} parent=1 // pred_region
      _
    $region21: #{tpu_custom_call.1} parent=1 // pred_fallthru
      _
    // Predicated region
    $region22: #{tpu_custom_call.1} parent=1 // pred_check
      _
    $region23: #{tpu_custom_call.1} parent=1 // pred_check_branch
      %44 = sbr.rel (0) target = $region25
    $region24: #{tpu_custom_call.1} parent=1 // pred_region
      %45 = dma.done [#allocation3], 512
    $region25: #{tpu_custom_call.1} parent=1 // pred_fallthru
      _
    // Predicated region
    $region26: #{tpu_custom_call.1} parent=1 // pred_check
      _
    $region27: #{tpu_custom_call.1} parent=1 // pred_check_branch
      %47 = sbr.rel (0) target = $region29
    $region28: #{tpu_custom_call.1} parent=1 // pred_region
      %48 = dma.done [#allocation6], 512
    $region29: #{tpu_custom_call.1} parent=1 // pred_fallthru
      _
    %v49 = vld [vmem:[%s4] sm:$0x1]
    %v50 = vld [vmem:[%s4 + $0x1] sm:$0x1]
    %v51 = vld [vmem:[%s4 + $0x2] sm:$0x1]
    %v52 = vld [vmem:[%s0] sm:$0xff]
    %v53 = vld [vmem:[%s0 + $0x8] sm:$0xff]
    %v54 = vld [vmem:[%s1] sm:$0xff]
    %v55 = vlaneseq
    %v56 = vshrl.u32 %v55, 7
    %v57 = vsub.s32 0, %v56
    %v58 = vrot.slane %v49, %v57
    %vm59 = vcmask 64512
    %v61 = vsel %vm59, %v52, 0
    %v64 = vsel %vm59, %v53, 0
    %66 = vmatprep.subr.mxu0 0.0
    %67 = vmatpush1.msra.mxu0 0.0
    %68 = vmatprep.subr.mxu0 0.0
    %69 = vmatpush1.msra.mxu0 0.0
    %70 = vmatprep.subr.mxu0 0.0
    %71 = vmatpush1.msra.mxu0 0.0
    %72 = vmatprep.subr.mxu0 0.0
    %73 = vmatpush1.msra.mxu0 0.0
    %74 = vmatprep.subr.mxu0 0.0
    %75 = vmatpush1.msra.mxu0 0.0
    %76 = vmatprep.subr.mxu0 0.0
    %77 = vmatpush1.msra.mxu0 0.0
    %78 = vmatprep.subr.mxu0 0.0
    %79 = vmatpush1.msra.mxu0 0.0
    %80 = vmatprep.subr.mxu0 0.0
    %81 = vmatpush1.msra.mxu0 0.0
    %82 = vmatprep.subr.mxu0 0.0
    %83 = vmatpush1.msra.mxu0 0.0
    %84 = vmatprep.subr.mxu0 0.0
    %85 = vmatpush1.msra.mxu0 0.0
    %86 = vmatprep.subr.mxu0 0.0
    %87 = vmatpush1.msra.mxu0 0.0
    %88 = vmatprep.subr.mxu0 0.0
    %89 = vmatpush1.msra.mxu0 0.0
    %90 = vmatprep.subr.mxu0 0.0
    %91 = vmatpush1.msra.mxu0 0.0
    %92 = vmatprep.subr.mxu0 0.0
    %93 = vmatpush1.msra.mxu0 0.0
    %94 = vmatprep.subr.mxu0 0.0
    %95 = vmatpush1.msra.mxu0 0.0
    %96 = vmatprep.subr.mxu0 0.0
    %97 = vmatpush1.msra.mxu0 %v54
    %98 = vmatprep.subr.mxu0 0.0
    %99 = vmatpush2.msra.mxu0 0.0
    %100 = vmatprep.subr.mxu0 0.0
    %101 = vmatpush2.msra.mxu0 0.0
    %102 = vmatprep.subr.mxu0 0.0
    %103 = vmatpush2.msra.mxu0 0.0
    %104 = vmatprep.subr.mxu0 0.0
    %105 = vmatpush2.msra.mxu0 0.0
    %106 = vmatprep.subr.mxu0 0.0
    %107 = vmatpush2.msra.mxu0 0.0
    %108 = vmatprep.subr.mxu0 0.0
    %109 = vmatpush2.msra.mxu0 0.0
    %110 = vmatprep.subr.mxu0 0.0
    %111 = vmatpush2.msra.mxu0 0.0
    %112 = vmatprep.subr.mxu0 0.0
    %113 = vmatpush2.msra.mxu0 0.0
    %114 = vmatprep.subr.mxu0 0.0
    %115 = vmatpush2.msra.mxu0 0.0
    %116 = vmatprep.subr.mxu0 0.0
    %117 = vmatpush2.msra.mxu0 0.0
    %118 = vmatprep.subr.mxu0 0.0
    %119 = vmatpush2.msra.mxu0 0.0
    %120 = vmatprep.subr.mxu0 0.0
    %121 = vmatpush2.msra.mxu0 0.0
    %122 = vmatprep.subr.mxu0 0.0
    %123 = vmatpush2.msra.mxu0 0.0
    %124 = vmatprep.subr.mxu0 0.0
    %125 = vmatpush2.msra.mxu0 0.0
    %126 = vmatprep.subr.mxu0 0.0
    %127 = vmatpush2.msra.mxu0 0.0
    %128 = vmatprep.subr.mxu0 0.0
    %129 = vmatpush2.msra.mxu0 0.0
    %130 = vmatprep.mubr.f32.mxu0 0.0
    %131 = vmatmul.mubr.f32.gmra.mxu0 %v61
    %v132 = vpop.f32.mrf.mxu0
    %v133 = vadd.f32 %v58, %v132
    %v134 = vpop.f32.mrf.mxu0
    %135 = vmatprep.mubr.f32.mxu0 0.0
    %136 = vmatmul.mubr.f32.gmra.mxu0 %v64
    %v137 = vpop.f32.mrf.mxu0
    %v138 = vadd.f32 %v58, %v137
    %v139 = vpop.f32.mrf.mxu0
    %140 = vdwg.mxu0
    %v141 = vmax.f32 %v133, 0.0
    %v142 = vmax.f32 %v138, 0.0
    %v143 = vld [vmem:[#allocation2] sm:$0xff]
    %v144 = vld [vmem:[#allocation2 + $0x8] sm:$0xff]
    %v145 = vld [vmem:[#allocation2 + $0x10] sm:$0xff]
    %v146 = vld [vmem:[#allocation2 + $0x18] sm:$0xff]
    %v147 = vlaneseq
    %v148 = vshrl.u32 %v147, 7
    %v149 = vsub.s32 0, %v148
    %v150 = vrot.slane %v50, %v149
    %vm151 = vcmask 261120
    %v153 = vsel %vm151, %v141, 0
    %v156 = vsel %vm151, %v142, 0
    %158 = vmatprep.subr.mxu0 0.0
    %159 = vmatpush1.msra.mxu0 0.0
    %160 = vmatprep.subr.mxu0 0.0
    %161 = vmatpush1.msra.mxu0 0.0
    %162 = vmatprep.subr.mxu0 0.0
    %163 = vmatpush1.msra.mxu0 0.0
    %164 = vmatprep.subr.mxu0 0.0
    %165 = vmatpush1.msra.mxu0 0.0
    %166 = vmatprep.subr.mxu0 0.0
    %167 = vmatpush1.msra.mxu0 0.0
    %168 = vmatprep.subr.mxu0 0.0
    %169 = vmatpush1.msra.mxu0 0.0
    %170 = vmatprep.subr.mxu0 0.0
    %171 = vmatpush1.msra.mxu0 0.0
    %172 = vmatprep.subr.mxu0 0.0
    %173 = vmatpush1.msra.mxu0 0.0
    %174 = vmatprep.subr.mxu0 0.0
    %175 = vmatpush1.msra.mxu0 0.0
    %176 = vmatprep.subr.mxu0 0.0
    %177 = vmatpush1.msra.mxu0 0.0
    %178 = vmatprep.subr.mxu0 0.0
    %179 = vmatpush1.msra.mxu0 0.0
    %180 = vmatprep.subr.mxu0 0.0
    %181 = vmatpush1.msra.mxu0 0.0
    %182 = vmatprep.subr.mxu0 0.0
    %183 = vmatpush1.msra.mxu0 %v146
    %184 = vmatprep.subr.mxu0 0.0
    %185 = vmatpush1.msra.mxu0 %v145
    %186 = vmatprep.subr.mxu0 0.0
    %187 = vmatpush1.msra.mxu0 %v144
    %188 = vmatprep.subr.mxu0 0.0
    %189 = vmatpush1.msra.mxu0 %v143
    %190 = vmatprep.subr.mxu0 0.0
    %191 = vmatpush2.msra.mxu0 0.0
    %192 = vmatprep.subr.mxu0 0.0
    %193 = vmatpush2.msra.mxu0 0.0
    %194 = vmatprep.subr.mxu0 0.0
    %195 = vmatpush2.msra.mxu0 0.0
    %196 = vmatprep.subr.mxu0 0.0
    %197 = vmatpush2.msra.mxu0 0.0
    %198 = vmatprep.subr.mxu0 0.0
    %199 = vmatpush2.msra.mxu0 0.0
    %200 = vmatprep.subr.mxu0 0.0
    %201 = vmatpush2.msra.mxu0 0.0
    %202 = vmatprep.subr.mxu0 0.0
    %203 = vmatpush2.msra.mxu0 0.0
    %204 = vmatprep.subr.mxu0 0.0
    %205 = vmatpush2.msra.mxu0 0.0
    %206 = vmatprep.subr.mxu0 0.0
    %207 = vmatpush2.msra.mxu0 0.0
    %208 = vmatprep.subr.mxu0 0.0
    %209 = vmatpush2.msra.mxu0 0.0
    %210 = vmatprep.subr.mxu0 0.0
    %211 = vmatpush2.msra.mxu0 0.0
    %212 = vmatprep.subr.mxu0 0.0
    %213 = vmatpush2.msra.mxu0 0.0
    %214 = vmatprep.subr.mxu0 0.0
    %215 = vmatpush2.msra.mxu0 0.0
    %216 = vmatprep.subr.mxu0 0.0
    %217 = vmatpush2.msra.mxu0 0.0
    %218 = vmatprep.subr.mxu0 0.0
    %219 = vmatpush2.msra.mxu0 0.0
    %220 = vmatprep.subr.mxu0 0.0
    %221 = vmatpush2.msra.mxu0 0.0
    %222 = vmatprep.mubr.f32.mxu0 0.0
    %223 = vmatmul.mubr.f32.gmra.mxu0 %v153
    %v224 = vpop.f32.mrf.mxu0
    %v225 = vadd.f32 %v150, %v224
    %v226 = vpop.f32.mrf.mxu0
    %227 = vmatprep.mubr.f32.mxu0 0.0
    %228 = vmatmul.mubr.f32.gmra.mxu0 %v156
    %v229 = vpop.f32.mrf.mxu0
    %v230 = vadd.f32 %v150, %v229
    %v231 = vpop.f32.mrf.mxu0
    %232 = vdwg.mxu0
    %v233 = vmax.f32 %v225, 0.0
    %v234 = vmax.f32 %v230, 0.0
    %v235 = vld [vmem:[#allocation5] sm:$0xff]
    %v236 = vld [vmem:[#allocation5 + $0x8] sm:$0xff]
    %v237 = vld [vmem:[#allocation5 + $0x10] sm:$0xff]
    %v238 = vld [vmem:[#allocation5 + $0x18] sm:$0xff]
    %v239 = vlaneseq
    %v240 = vshrl.u32 %v239, 7
    %v241 = vsub.s32 0, %v240
    %v242 = vrot.slane %v51, %v241
    %v244 = vsel %vm151, %v233, 0
    %v247 = vsel %vm151, %v234, 0
    %249 = vmatprep.subr.mxu0 0.0
    %250 = vmatpush1.msra.mxu0 0.0
    %251 = vmatprep.subr.mxu0 0.0
    %252 = vmatpush1.msra.mxu0 0.0
    %253 = vmatprep.subr.mxu0 0.0
    %254 = vmatpush1.msra.mxu0 0.0
    %255 = vmatprep.subr.mxu0 0.0
    %256 = vmatpush1.msra.mxu0 0.0
    %257 = vmatprep.subr.mxu0 0.0
    %258 = vmatpush1.msra.mxu0 0.0
    %259 = vmatprep.subr.mxu0 0.0
    %260 = vmatpush1.msra.mxu0 0.0
    %261 = vmatprep.subr.mxu0 0.0
    %262 = vmatpush1.msra.mxu0 0.0
    %263 = vmatprep.subr.mxu0 0.0
    %264 = vmatpush1.msra.mxu0 0.0
    %265 = vmatprep.subr.mxu0 0.0
    %266 = vmatpush1.msra.mxu0 0.0
    %267 = vmatprep.subr.mxu0 0.0
    %268 = vmatpush1.msra.mxu0 0.0
    %269 = vmatprep.subr.mxu0 0.0
    %270 = vmatpush1.msra.mxu0 0.0
    %271 = vmatprep.subr.mxu0 0.0
    %272 = vmatpush1.msra.mxu0 0.0
    %273 = vmatprep.subr.mxu0 0.0
    %274 = vmatpush1.msra.mxu0 %v238
    %275 = vmatprep.subr.mxu0 0.0
    %276 = vmatpush1.msra.mxu0 %v237
    %277 = vmatprep.subr.mxu0 0.0
    %278 = vmatpush1.msra.mxu0 %v236
    %279 = vmatprep.subr.mxu0 0.0
    %280 = vmatpush1.msra.mxu0 %v235
    %281 = vmatprep.subr.mxu0 0.0
    %282 = vmatpush2.msra.mxu0 0.0
    %283 = vmatprep.subr.mxu0 0.0
    %284 = vmatpush2.msra.mxu0 0.0
    %285 = vmatprep.subr.mxu0 0.0
    %286 = vmatpush2.msra.mxu0 0.0
    %287 = vmatprep.subr.mxu0 0.0
    %288 = vmatpush2.msra.mxu0 0.0
    %289 = vmatprep.subr.mxu0 0.0
    %290 = vmatpush2.msra.mxu0 0.0
    %291 = vmatprep.subr.mxu0 0.0
    %292 = vmatpush2.msra.mxu0 0.0
    %293 = vmatprep.subr.mxu0 0.0
    %294 = vmatpush2.msra.mxu0 0.0
    %295 = vmatprep.subr.mxu0 0.0
    %296 = vmatpush2.msra.mxu0 0.0
    %297 = vmatprep.subr.mxu0 0.0
    %298 = vmatpush2.msra.mxu0 0.0
    %299 = vmatprep.subr.mxu0 0.0
    %300 = vmatpush2.msra.mxu0 0.0
    %301 = vmatprep.subr.mxu0 0.0
    %302 = vmatpush2.msra.mxu0 0.0
    %303 = vmatprep.subr.mxu0 0.0
    %304 = vmatpush2.msra.mxu0 0.0
    %305 = vmatprep.subr.mxu0 0.0
    %306 = vmatpush2.msra.mxu0 0.0
    %307 = vmatprep.subr.mxu0 0.0
    %308 = vmatpush2.msra.mxu0 0.0
    %309 = vmatprep.subr.mxu0 0.0
    %310 = vmatpush2.msra.mxu0 0.0
    %311 = vmatprep.subr.mxu0 0.0
    %312 = vmatpush2.msra.mxu0 0.0
    %313 = vmatprep.mubr.f32.mxu0 0.0
    %314 = vmatmul.mubr.f32.gmra.mxu0 %v244
    %v315 = vpop.f32.mrf.mxu0
    %v316 = vadd.f32 %v242, %v315
    %v317 = vpop.f32.mrf.mxu0
    %318 = vmatprep.mubr.f32.mxu0 0.0
    %319 = vmatmul.mubr.f32.gmra.mxu0 %v247
    %v320 = vpop.f32.mrf.mxu0
    %v321 = vadd.f32 %v242, %v320
    %v322 = vpop.f32.mrf.mxu0
    %323 = vdwg.mxu0
    %324 = vst [vmem:[#allocation7] sm:$0xff] %v316
    %325 = vst [vmem:[#allocation7 + $0x8] sm:$0xff] %v321
    // Predicated region
    $region30: #{tpu_custom_call.1} parent=1 // pred_check
      _
    $region31: #{tpu_custom_call.1} parent=1 // pred_check_branch
      %327 = sbr.rel (0) target = $region33
    $region32: #{tpu_custom_call.1} parent=1 // pred_region
      %s329 = ssub.s32 256, 256
      %330 = vsyncadd [#allocation4], %s329
      %s331 = sshll.u32 [#allocation7], 4
      %s332 = int_to_ptr.vmem [resolvable:$true] %s331
      %337 = dma.vmem_to_hbm [thread:$0]  %s332, 256, %s5, [#allocation4], 128, 128, 8
    $region33: #{tpu_custom_call.1} parent=1 // pred_fallthru
      _
    // Predicated region
    $region34: #{tpu_custom_call.1} parent=1 // pred_check
      _
    $region35: #{tpu_custom_call.1} parent=1 // pred_check_branch
      %339 = sbr.rel (0) target = $region37
    $region36: #{tpu_custom_call.1} parent=1 // pred_region
      %340 = dma.done [#allocation4], 256
    $region37: #{tpu_custom_call.1} parent=1 // pred_fallthru
      _
    %341 = vsyncpa [#allocation3], 1
    %342 = vsyncpa [#allocation6], 1
    %343 = vsyncpa [#allocation4], 1

</llo_original>
